<compile_context>
chip_gen: v7x
topology: tpu7x:2x2x1
jax: 0.10.0
libtpu: 0.0.40
codegen_flags: <defaults>
</compile_context>

<pallas_src>
import functools

import jax
import jax.numpy as jnp
from jax.experimental import pallas as pl
from jax.experimental.pallas import tpu as pltpu


_LANE = 128  # vreg lane width


def _round_up(x, m):
    return ((x + m - 1) // m) * m


def _to_action_kernel(a_ref, k_ref, w1a_ref, w1k_ref, b1_ref, w2_ref, b2_ref,
                      o_ref):
    # Layer 1: Linear(2H -> H) + ReLU, with the concat replaced by a split dot:
    #   h = [action | keyword] @ W1 = action @ W1_top + keyword @ W1_bot
    h = jnp.dot(a_ref[...], w1a_ref[...], preferred_element_type=jnp.float32)
    h = h + jnp.dot(k_ref[...], w1k_ref[...],
                    preferred_element_type=jnp.float32)
    h = jnp.maximum(h + b1_ref[...], 0.0)
    # TODO(synk): Dropout is the identity in eval-mode forward; training-mode
    # dropout would use pltpu.prng_seed / pltpu.stateful_bernoulli here.
    # Layer 2: Linear(H -> H) + ReLU  (h's padded lanes are exact zeros, and
    # w2's padded rows are zeros, so the padding contributes nothing).
    y = jnp.dot(h.astype(w2_ref.dtype), w2_ref[...],
                preferred_element_type=jnp.float32)
    y = jnp.maximum(y + b2_ref[...], 0.0)
    # Store only the real H output lanes; no post-call slice is needed.
    o_ref[...] = y[:, : o_ref.shape[1]].astype(o_ref.dtype)


def prepare_params(w1, b1, w2, b2, weight_dtype=None):
    """Pad + split the constant weights ONCE (call at module init, not per step).

    w1: (2H, H)  b1: (H,)   -- first Linear, (in, out) layout (= torch weight.T)
    w2: (H, H)   b2: (H,)   -- second Linear, (in, out) layout
    weight_dtype: optionally store weights in bf16 to halve per-call DMA bytes
                  (costs a little precision on the second matmul input cast).
    """
    H = w2.shape[0]
    assert w1.shape == (2 * H, H) and b1.shape == (H,)
    assert w2.shape == (H, H) and b2.shape == (H,)
    dt = w1.dtype if weight_dtype is None else weight_dtype
    Hp = _round_up(H, _LANE)
    # Split W1 into its action / keyword halves (kills the per-call concat) and
    # pad the output (lane) dim of both layers to 128 so matmul outputs and the
    # internal layout are lane-dense.  Padded rows/cols are zeros.
    w1a = jnp.zeros((H, Hp), dt).at[:, :H].set(w1[:H].astype(dt))
    w1k = jnp.zeros((H, Hp), dt).at[:, :H].set(w1[H:].astype(dt))
    b1p = jnp.zeros((1, Hp), dt).at[0, :H].set(b1.astype(dt))
    w2p = jnp.zeros((Hp, Hp), dt).at[:H, :H].set(w2.astype(dt))
    b2p = jnp.zeros((1, Hp), dt).at[0, :H].set(b2.astype(dt))
    return (w1a, w1k, b1p, w2p, b2p)


def to_action_forward(action, keyword, params, *, block_b=128):
    """Pallas implementation of ToActionModule.forward (eval mode), batched.

    action, keyword: (H,) or (B, H)
    params: output of prepare_params (pre-padded once; do NOT rebuild per call)
    returns: (H,) or (B, H), matching the input rank
    """
    w1a, w1k, b1p, w2p, b2p = params
    single = action.ndim == 1
    if single:
        action = action[None]
        keyword = keyword[None]
    B, H = action.shape
    assert keyword.shape == (B, H)
    assert w1a.shape[0] == H and w2p.shape[0] == w2p.shape[1]
    dtype = action.dtype
    Hp = w2p.shape[0]

    # Batch tiling: one full-array block if the batch fits, otherwise a grid of
    # block_b-row tiles (weights remain resident across the grid).
    if B <= block_b:
        TB, Bp = B, B
    else:
        TB = block_b
        Bp = _round_up(B, TB)
        if Bp != B:  # rare remainder path; pad activations, slice result back
            action = jnp.pad(action, ((0, Bp - B), (0, 0)))
            keyword = jnp.pad(keyword, ((0, Bp - B), (0, 0)))
    grid = (Bp // TB,)

    resident = lambda i: (0, 0)  # weights/biases: same block for every tile
    itemsize = jnp.dtype(dtype).itemsize
    param_bytes = sum(int(p.size) * jnp.dtype(p.dtype).itemsize for p in params)
    cost = pl.CostEstimate(
        flops=2 * Bp * (2 * H * Hp + Hp * Hp),
        transcendentals=0,
        bytes_accessed=3 * Bp * H * itemsize + param_bytes,
    )

    out = pl.pallas_call(
        _to_action_kernel,
        out_shape=jax.ShapeDtypeStruct((Bp, H), dtype),
        grid=grid,
        in_specs=[
            pl.BlockSpec((TB, H), lambda i: (i, 0)),     # action tile
            pl.BlockSpec((TB, H), lambda i: (i, 0)),     # keyword tile
            pl.BlockSpec(w1a.shape, resident),
            pl.BlockSpec(w1k.shape, resident),
            pl.BlockSpec(b1p.shape, resident),
            pl.BlockSpec(w2p.shape, resident),
            pl.BlockSpec(b2p.shape, resident),
        ],
        out_specs=pl.BlockSpec((TB, H), lambda i: (i, 0)),
        compiler_params=pltpu.CompilerParams(
            dimension_semantics=("parallel",)),  # v7x: shard batch tiles on 2 TCs
        cost_estimate=cost,
    )(action, keyword, w1a, w1k, b1p, w2p, b2p)

    if Bp != B:
        out = out[:B]
    return out[0] if single else out


if __name__ == "__main__":
    key = jax.random.PRNGKey(0)
    k_a, k_k, k_w1, k_b1, k_w2, k_b2 = jax.random.split(key, 6)
    H = 32
    B = 4
    dtype = jnp.float32

    action = jax.random.normal(k_a, (B, H), dtype)
    keyword = jax.random.normal(k_k, (B, H), dtype)
    # Weights in (in, out) layout (== torch Linear weight transposed), scaled
    # like a standard init so values stay O(1).
    w1 = jax.random.normal(k_w1, (2 * H, H), dtype) * (1.0 / jnp.sqrt(2.0 * H))
    b1 = jax.random.normal(k_b1, (H,), dtype) * 0.1
    w2 = jax.random.normal(k_w2, (H, H), dtype) * (1.0 / jnp.sqrt(1.0 * H))
    b2 = jax.random.normal(k_b2, (H,), dtype) * 0.1

    # One-time weight preparation (hoisted out of the per-call hot path).
    params = jax.block_until_ready(prepare_params(w1, b1, w2, b2))

    fwd = jax.jit(functools.partial(to_action_forward))
    out = jax.block_until_ready(fwd(action, keyword, params))

    # Pure-JAX reference (eval-mode dropout == identity).
    x = jnp.concatenate([action, keyword], axis=-1)
    h_ref = jnp.maximum(
        jnp.dot(x, w1, precision=jax.lax.Precision.HIGHEST) + b1, 0.0)
    ref = jnp.maximum(
        jnp.dot(h_ref, w2, precision=jax.lax.Precision.HIGHEST) + b2, 0.0)

    assert out.shape == ref.shape and out.dtype == ref.dtype
    assert jnp.allclose(out, ref, rtol=1e-2, atol=1e-2), "batched mismatch"

    # Single-sample path (matches the original module signature: (H,) -> (H,)).
    out1 = jax.block_until_ready(fwd(action[0], keyword[0], params))
    assert out1.shape == (H,) and jnp.allclose(out1, ref[0], rtol=1e-2, atol=1e-2)

    print("KERNEL_OK")
</pallas_src>

<mosaic_0001>
module attributes {stable_mosaic.version = 11 : i64} {
  func.func @_to_action_kernel(%arg0: i32, %arg1: memref<4x32xf32, #tpu.memory_space<vmem>>, %arg2: memref<4x32xf32, #tpu.memory_space<vmem>>, %arg3: memref<32x128xf32, #tpu.memory_space<vmem>>, %arg4: memref<32x128xf32, #tpu.memory_space<vmem>>, %arg5: memref<1x128xf32, #tpu.memory_space<vmem>>, %arg6: memref<128x128xf32, #tpu.memory_space<vmem>>, %arg7: memref<1x128xf32, #tpu.memory_space<vmem>>, %arg8: memref<4x32xf32, #tpu.memory_space<vmem>>) attributes {dimension_semantics = [#tpu.dimension_semantics<parallel>], iteration_bounds = array<i64: 1>, scalar_prefetch = 0 : i64, scratch_operands = 0 : i64, tpu.core_type = #tpu.core_type<tc>, window_params = [{transform_indices = @transform_0, window_bounds = array<i64: 4, 32>}, {transform_indices = @transform_1, window_bounds = array<i64: 4, 32>}, {pipeline_mode = #tpu.pipeline_mode<synchronous>, transform_indices = @transform_2, window_bounds = array<i64: 32, 128>}, {pipeline_mode = #tpu.pipeline_mode<synchronous>, transform_indices = @transform_3, window_bounds = array<i64: 32, 128>}, {pipeline_mode = #tpu.pipeline_mode<synchronous>, transform_indices = @transform_4, window_bounds = array<i64: 1, 128>}, {pipeline_mode = #tpu.pipeline_mode<synchronous>, transform_indices = @transform_5, window_bounds = array<i64: 128, 128>}, {pipeline_mode = #tpu.pipeline_mode<synchronous>, transform_indices = @transform_6, window_bounds = array<i64: 1, 128>}, {transform_indices = @transform_7, window_bounds = array<i64: 4, 32>}]} {
    %c0 = arith.constant 0 : index
    %c0_0 = arith.constant 0 : index
    %0 = vector.load %arg1[%c0, %c0_0] : memref<4x32xf32, #tpu.memory_space<vmem>>, vector<4x32xf32>
    %c0_1 = arith.constant 0 : index
    %c0_2 = arith.constant 0 : index
    %1 = vector.load %arg3[%c0_1, %c0_2] : memref<32x128xf32, #tpu.memory_space<vmem>>, vector<32x128xf32>
    %cst = arith.constant dense<0.000000e+00> : vector<4x128xf32>
    %2 = tpu.matmul %0, %1, %cst {dimension_numbers = #tpu.dot_dimension_numbers<[1], [0], [0], [1], [0, 0, 1, 1], [], []>} : vector<4x32xf32>, vector<32x128xf32>, vector<4x128xf32> -> vector<4x128xf32>
    %c0_3 = arith.constant 0 : index
    %c0_4 = arith.constant 0 : index
    %3 = vector.load %arg2[%c0_3, %c0_4] : memref<4x32xf32, #tpu.memory_space<vmem>>, vector<4x32xf32>
    %c0_5 = arith.constant 0 : index
    %c0_6 = arith.constant 0 : index
    %4 = vector.load %arg4[%c0_5, %c0_6] : memref<32x128xf32, #tpu.memory_space<vmem>>, vector<32x128xf32>
    %cst_7 = arith.constant dense<0.000000e+00> : vector<4x128xf32>
    %5 = tpu.matmul %3, %4, %cst_7 {dimension_numbers = #tpu.dot_dimension_numbers<[1], [0], [0], [1], [0, 0, 1, 1], [], []>} : vector<4x32xf32>, vector<32x128xf32>, vector<4x128xf32> -> vector<4x128xf32>
    %6 = arith.addf %2, %5 : vector<4x128xf32>
    %c0_8 = arith.constant 0 : index
    %c0_9 = arith.constant 0 : index
    %7 = vector.load %arg5[%c0_8, %c0_9] : memref<1x128xf32, #tpu.memory_space<vmem>>, vector<1x128xf32>
    %8 = vector.broadcast %7 : vector<1x128xf32> to vector<4x128xf32>
    %9 = arith.addf %6, %8 : vector<4x128xf32>
    %cst_10 = arith.constant 0.000000e+00 : f32
    %10 = vector.broadcast %cst_10 : f32 to vector<4x128xf32>
    %11 = arith.maximumf %9, %10 : vector<4x128xf32>
    %c0_11 = arith.constant 0 : index
    %c0_12 = arith.constant 0 : index
    %12 = vector.load %arg6[%c0_11, %c0_12] : memref<128x128xf32, #tpu.memory_space<vmem>>, vector<128x128xf32>
    %cst_13 = arith.constant dense<0.000000e+00> : vector<4x128xf32>
    %13 = tpu.matmul %11, %12, %cst_13 {dimension_numbers = #tpu.dot_dimension_numbers<[1], [0], [0], [1], [0, 0, 1, 1], [], []>} : vector<4x128xf32>, vector<128x128xf32>, vector<4x128xf32> -> vector<4x128xf32>
    %c0_14 = arith.constant 0 : index
    %c0_15 = arith.constant 0 : index
    %14 = vector.load %arg7[%c0_14, %c0_15] : memref<1x128xf32, #tpu.memory_space<vmem>>, vector<1x128xf32>
    %15 = vector.broadcast %14 : vector<1x128xf32> to vector<4x128xf32>
    %16 = arith.addf %13, %15 : vector<4x128xf32>
    %cst_16 = arith.constant 0.000000e+00 : f32
    %17 = vector.broadcast %cst_16 : f32 to vector<4x128xf32>
    %18 = arith.maximumf %16, %17 : vector<4x128xf32>
    %19 = vector.extract_strided_slice %18 {offsets = [0, 0], sizes = [4, 32], strides = [1, 1]} : vector<4x128xf32> to vector<4x32xf32>
    %c0_17 = arith.constant 0 : index
    %c0_18 = arith.constant 0 : index
    %20 = vector.load %arg8[%c0_17, %c0_18] : memref<4x32xf32, #tpu.memory_space<vmem>>, vector<4x32xf32>
    tpu.vector_store %arg8[%c0_17, %c0_18], %19 {strides = array<i32>} : memref<4x32xf32, #tpu.memory_space<vmem>>, vector<4x32xf32>,
    return
  }
  func.func @transform_0(%arg0: i32) -> (i32, i32) {
    %c0_i32 = arith.constant 0 : i32
    %c0_i32_0 = arith.constant 0 : i32
    return %arg0, %c0_i32 : i32, i32
  }
  func.func @transform_1(%arg0: i32) -> (i32, i32) {
    %c0_i32 = arith.constant 0 : i32
    %c0_i32_0 = arith.constant 0 : i32
    return %arg0, %c0_i32 : i32, i32
  }
  func.func @transform_2(%arg0: i32) -> (i32, i32) {
    %c0_i32 = arith.constant 0 : i32
    %c0_i32_0 = arith.constant 0 : i32
    %c0_i32_1 = arith.constant 0 : i32
    return %c0_i32, %c0_i32_0 : i32, i32
  }
  func.func @transform_3(%arg0: i32) -> (i32, i32) {
    %c0_i32 = arith.constant 0 : i32
    %c0_i32_0 = arith.constant 0 : i32
    %c0_i32_1 = arith.constant 0 : i32
    return %c0_i32, %c0_i32_0 : i32, i32
  }
  func.func @transform_4(%arg0: i32) -> (i32, i32) {
    %c0_i32 = arith.constant 0 : i32
    %c0_i32_0 = arith.constant 0 : i32
    %c0_i32_1 = arith.constant 0 : i32
    return %c0_i32, %c0_i32_0 : i32, i32
  }
  func.func @transform_5(%arg0: i32) -> (i32, i32) {
    %c0_i32 = arith.constant 0 : i32
    %c0_i32_0 = arith.constant 0 : i32
    %c0_i32_1 = arith.constant 0 : i32
    return %c0_i32, %c0_i32_0 : i32, i32
  }
  func.func @transform_6(%arg0: i32) -> (i32, i32) {
    %c0_i32 = arith.constant 0 : i32
    %c0_i32_0 = arith.constant 0 : i32
    %c0_i32_1 = arith.constant 0 : i32
    return %c0_i32, %c0_i32_0 : i32, i32
  }
  func.func @transform_7(%arg0: i32) -> (i32, i32) {
    %c0_i32 = arith.constant 0 : i32
    %c0_i32_0 = arith.constant 0 : i32
    return %arg0, %c0_i32 : i32, i32
  }
}

</mosaic_0001>

<llo_original>
// kernel: to_action_forward.1
$region0: #{to_action_forward.1}
  #allocation0 [shape = 'u32[]', space=smem, size = 0x4, offset = 0x4, fixed_abs, tag = 'smem constant byte address 0x4 - core index']
  #allocation1 [shape = 'u32[144,128]{1,0:T(1,128)}', space=vmem, size = 0x12000, scoped, tag = 'internal scratch']
  %s0 = inlined_call_operand.hbm [shape: f32[4,32], index: 0, kind: input, shape index: {}]
  %s1 = inlined_call_operand.hbm [shape: f32[4,32], index: 1, kind: input, shape index: {}]
  %s2 = inlined_call_operand.hbm [shape: f32[32,128], index: 2, kind: input, shape index: {}]
  %s3 = inlined_call_operand.hbm [shape: f32[32,128], index: 3, kind: input, shape index: {}]
  %s4 = inlined_call_operand.vmem [shape: f32[1,128], index: 4, kind: input, shape index: {}]
  %s5 = inlined_call_operand.hbm [shape: f32[128,128], index: 5, kind: input, shape index: {}]
  %s6 = inlined_call_operand.vmem [shape: f32[1,128], index: 6, kind: input, shape index: {}]
  %s7 = inlined_call_operand.hbm [shape: f32[4,32], index: 7, kind: output, shape index: {}]
  %s8 = sld [smem:[#allocation0]]
  $region58: #{to_action_forward.1} parent=0
    _
  %s10 = ssub.s32 1, %s8
  %s11 = scalar_select 0, %s10, %s8
  $region1: #{to_action_forward.1} parent=0
    #allocation2 [shape = 'u8[2048]{0}', space=vmem, size = 0x800, scoped, tag = 'input window, operand 0, single buffered']
    #allocation3 [shape = 's32[1]{0}', space=sflag, size = 0x4, scoped, tag = 'scoped memory for to_action_forward.1']
    #allocation4 [shape = 's32[1]{0}', space=sflag, size = 0x4, scoped, tag = 'scoped memory for to_action_forward.1']
    #allocation5 [shape = 'u8[2048]{0}', space=vmem, size = 0x800, scoped, tag = 'input window, operand 1, single buffered']
    #allocation6 [shape = 's32[1]{0}', space=sflag, size = 0x4, scoped, tag = 'scoped memory for to_action_forward.1']
    #allocation7 [shape = 'u8[16384]{0}', space=vmem, size = 0x4000, scoped, tag = 'input window, operand 2, single buffered']
    #allocation8 [shape = 'u8[16384]{0}', space=vmem, size = 0x4000, scoped, tag = 'input window, operand 3, single buffered']
    #allocation9 [shape = 's32[1]{0}', space=sflag, size = 0x4, scoped, tag = 'scoped memory for to_action_forward.1']
    #allocation10 [shape = 'u8[65536]{0}', space=vmem, size = 0x10000, scoped, tag = 'input window, operand 5, single buffered']
    #allocation11 [shape = 'u8[2048]{0}', space=vmem, size = 0x800, scoped, tag = 'output window, operand 0, single buffered']
    %12 = vsyncpa [#allocation3], 0
    %13 = vsyncpa [#allocation6], 0
    %14 = vsyncpa [#allocation9], 0
    %15 = vsyncpa [#allocation4], 0
    // Predicated region
    $region2: #{to_action_forward.1} parent=1 // pred_check
      _
    $region3: #{to_action_forward.1} parent=1 // pred_check_branch
      %17 = sbr.rel (0) target = $region5
    $region4: #{to_action_forward.1} parent=1 // pred_region
      %s19 = ssub.s32 64, 64
      %20 = vsyncadd [#allocation3], %s19
      %s22 = sshll.u32 [#allocation2], 4
      %s23 = int_to_ptr.vmem [resolvable:$true] %s22
      %25 = dma.hbm_to_vmem [thread:$0]  %s0, 64, %s23, [#allocation3]
    $region5: #{to_action_forward.1} parent=1 // pred_fallthru
      _
    // Predicated region
    $region6: #{to_action_forward.1} parent=1 // pred_check
      _
    $region7: #{to_action_forward.1} parent=1 // pred_check_branch
      %27 = sbr.rel (0) target = $region9
    $region8: #{to_action_forward.1} parent=1 // pred_region
      %s29 = ssub.s32 64, 64
      %30 = vsyncadd [#allocation6], %s29
      %s32 = sshll.u32 [#allocation5], 4
      %s33 = int_to_ptr.vmem [resolvable:$true] %s32
      %35 = dma.hbm_to_vmem [thread:$0]  %s1, 64, %s33, [#allocation6]
    $region9: #{to_action_forward.1} parent=1 // pred_fallthru
      _
    // Predicated region
    $region10: #{to_action_forward.1} parent=1 // pred_check
      _
    $region11: #{to_action_forward.1} parent=1 // pred_check_branch
      %37 = sbr.rel (0) target = $region13
    $region12: #{to_action_forward.1} parent=1 // pred_region
      %s39 = ssub.s32 512, 512
      %40 = vsyncadd [#allocation6], %s39
      %s41 = sshll.u32 [#allocation7], 4
      %s42 = int_to_ptr.vmem [resolvable:$true] %s41
      %47 = dma.hbm_to_vmem [thread:$0]  %s2, 512, %s42, [#allocation6], 128, 128, 8
    $region13: #{to_action_forward.1} parent=1 // pred_fallthru
      _
    // Predicated region
    $region14: #{to_action_forward.1} parent=1 // pred_check
      _
    $region15: #{to_action_forward.1} parent=1 // pred_check_branch
      %49 = sbr.rel (0) target = $region17
    $region16: #{to_action_forward.1} parent=1 // pred_region
      %s51 = ssub.s32 512, 512
      %52 = vsyncadd [#allocation9], %s51
      %s53 = sshll.u32 [#allocation8], 4
      %s54 = int_to_ptr.vmem [resolvable:$true] %s53
      %59 = dma.hbm_to_vmem [thread:$0]  %s3, 512, %s54, [#allocation9], 128, 128, 8
    $region17: #{to_action_forward.1} parent=1 // pred_fallthru
      _
    // Predicated region
    $region18: #{to_action_forward.1} parent=1 // pred_check
      _
    $region19: #{to_action_forward.1} parent=1 // pred_check_branch
      %61 = sbr.rel (0) target = $region21
    $region20: #{to_action_forward.1} parent=1 // pred_region
      _
    $region21: #{to_action_forward.1} parent=1 // pred_fallthru
      _
    // Predicated region
    $region22: #{to_action_forward.1} parent=1 // pred_check
      _
    $region23: #{to_action_forward.1} parent=1 // pred_check_branch
      %63 = sbr.rel (0) target = $region25
    $region24: #{to_action_forward.1} parent=1 // pred_region
      %s65 = ssub.s32 2048, 2048
      %66 = vsyncadd [#allocation9], %s65
      %s67 = sshll.u32 [#allocation10], 4
      %s68 = int_to_ptr.vmem [resolvable:$true] %s67
      %73 = dma.hbm_to_vmem [thread:$0]  %s5, 2048, %s68, [#allocation9], 128, 128, 8
    $region25: #{to_action_forward.1} parent=1 // pred_fallthru
      _
    // Predicated region
    $region26: #{to_action_forward.1} parent=1 // pred_check
      _
    $region27: #{to_action_forward.1} parent=1 // pred_check_branch
      %75 = sbr.rel (0) target = $region29
    $region28: #{to_action_forward.1} parent=1 // pred_region
      _
    $region29: #{to_action_forward.1} parent=1 // pred_fallthru
      _
    // Predicated region
    $region30: #{to_action_forward.1} parent=1 // pred_check
      _
    $region31: #{to_action_forward.1} parent=1 // pred_check_branch
      %77 = sbr.rel (0) target = $region33
    $region32: #{to_action_forward.1} parent=1 // pred_region
      %78 = dma.done [#allocation3], 64
    $region33: #{to_action_forward.1} parent=1 // pred_fallthru
      _
    // Predicated region
    $region34: #{to_action_forward.1} parent=1 // pred_check
      _
    $region35: #{to_action_forward.1} parent=1 // pred_check_branch
      %80 = sbr.rel (0) target = $region37
    $region36: #{to_action_forward.1} parent=1 // pred_region
      %81 = dma.done [#allocation6], 64
    $region37: #{to_action_forward.1} parent=1 // pred_fallthru
      _
    // Predicated region
    $region38: #{to_action_forward.1} parent=1 // pred_check
      _
    $region39: #{to_action_forward.1} parent=1 // pred_check_branch
      %83 = sbr.rel (0) target = $region41
    $region40: #{to_action_forward.1} parent=1 // pred_region
      %84 = dma.done [#allocation6], 512
    $region41: #{to_action_forward.1} parent=1 // pred_fallthru
      _
    // Predicated region
    $region42: #{to_action_forward.1} parent=1 // pred_check
      _
    $region43: #{to_action_forward.1} parent=1 // pred_check_branch
      %86 = sbr.rel (0) target = $region45
    $region44: #{to_action_forward.1} parent=1 // pred_region
      %87 = dma.done [#allocation9], 512
    $region45: #{to_action_forward.1} parent=1 // pred_fallthru
      _
    // Predicated region
    $region46: #{to_action_forward.1} parent=1 // pred_check
      _
    $region47: #{to_action_forward.1} parent=1 // pred_check_branch
      %89 = sbr.rel (0) target = $region49
    $region48: #{to_action_forward.1} parent=1 // pred_region
      %90 = dma.done [#allocation9], 2048
    $region49: #{to_action_forward.1} parent=1 // pred_fallthru
      _
    %v91 = vld [vmem:[#allocation2] sm:$0xf]
    %v92 = vld [vmem:[#allocation7] sm:$0xff]
    %v93 = vld [vmem:[#allocation7 + $0x8] sm:$0xff]
    %v94 = vld [vmem:[#allocation7 + $0x10] sm:$0xff]
    %v95 = vld [vmem:[#allocation7 + $0x18] sm:$0xff]
    %v96 = vld [vmem:[#allocation5] sm:$0xf]
    %v97 = vld [vmem:[#allocation8] sm:$0xff]
    %v98 = vld [vmem:[#allocation8 + $0x8] sm:$0xff]
    %v99 = vld [vmem:[#allocation8 + $0x10] sm:$0xff]
    %v100 = vld [vmem:[#allocation8 + $0x18] sm:$0xff]
    %vm101 = vcmask 261120
    %v103 = vsel %vm101, %v96, 0
    %105 = vmatprep.subr.mxu0 0.0
    %106 = vmatpush1.msra.mxu0 %v97
    %107 = vmatprep.subr.mxu0 0.0
    %108 = vmatpush1.msra.mxu0 %v98
    %109 = vmatprep.subr.mxu0 0.0
    %110 = vmatpush1.msra.mxu0 %v99
    %111 = vmatprep.subr.mxu0 0.0
    %112 = vmatpush1.msra.mxu0 %v100
    %113 = vmatprep.subr.mxu0 0.0
    %114 = vmatpush1.msra.mxu0 0.0
    %115 = vmatprep.subr.mxu0 0.0
    %116 = vmatpush1.msra.mxu0 0.0
    %117 = vmatprep.subr.mxu0 0.0
    %118 = vmatpush1.msra.mxu0 0.0
    %119 = vmatprep.subr.mxu0 0.0
    %120 = vmatpush1.msra.mxu0 0.0
    %121 = vmatprep.subr.mxu0 0.0
    %122 = vmatpush1.msra.mxu0 0.0
    %123 = vmatprep.subr.mxu0 0.0
    %124 = vmatpush1.msra.mxu0 0.0
    %125 = vmatprep.subr.mxu0 0.0
    %126 = vmatpush1.msra.mxu0 0.0
    %127 = vmatprep.subr.mxu0 0.0
    %128 = vmatpush1.msra.mxu0 0.0
    %129 = vmatprep.subr.mxu0 0.0
    %130 = vmatpush1.msra.mxu0 0.0
    %131 = vmatprep.subr.mxu0 0.0
    %132 = vmatpush1.msra.mxu0 0.0
    %133 = vmatprep.subr.mxu0 0.0
    %134 = vmatpush1.msra.mxu0 0.0
    %135 = vmatprep.subr.mxu0 0.0
    %136 = vmatpush1.msra.mxu0 0.0
    %137 = vmatprep.subr.mxu0 0.0
    %138 = vmatpush1.msra.mxu0 0.0
    %139 = vmatprep.subr.mxu0 0.0
    %140 = vmatpush1.msra.mxu0 0.0
    %141 = vmatprep.subr.mxu0 0.0
    %142 = vmatpush1.msra.mxu0 0.0
    %143 = vmatprep.subr.mxu0 0.0
    %144 = vmatpush1.msra.mxu0 0.0
    %145 = vmatprep.subr.mxu0 0.0
    %146 = vmatpush1.msra.mxu0 0.0
    %147 = vmatprep.subr.mxu0 0.0
    %148 = vmatpush1.msra.mxu0 0.0
    %149 = vmatprep.subr.mxu0 0.0
    %150 = vmatpush1.msra.mxu0 0.0
    %151 = vmatprep.subr.mxu0 0.0
    %152 = vmatpush1.msra.mxu0 0.0
    %153 = vmatprep.subr.mxu0 0.0
    %154 = vmatpush1.msra.mxu0 0.0
    %155 = vmatprep.subr.mxu0 0.0
    %156 = vmatpush1.msra.mxu0 0.0
    %157 = vmatprep.subr.mxu0 0.0
    %158 = vmatpush1.msra.mxu0 0.0
    %159 = vmatprep.subr.mxu0 0.0
    %160 = vmatpush1.msra.mxu0 0.0
    %161 = vmatprep.subr.mxu0 0.0
    %162 = vmatpush1.msra.mxu0 0.0
    %163 = vmatprep.subr.mxu0 0.0
    %164 = vmatpush1.msra.mxu0 0.0
    %165 = vmatprep.subr.mxu0 0.0
    %166 = vmatpush1.msra.mxu0 0.0
    %167 = vmatprep.subr.mxu0 0.0
    %168 = vmatpush1.msra.mxu0 0.0
    %169 = vmatprep.mubr.f32.mxu0 0.0
    %170 = vmatmul.mubr.f32.gmra.mrb[0].mxu0 %v103
    %v171 = vpop.f32.mrb[0].mxu0
    %v172 = vadd.f32 0.0, %v171
    %v173 = vpop.f32.mrb[0].mxu0
    %174 = vdwg.mxu0
    %v176 = vsel %vm101, %v91, 0
    %178 = vmatprep.subr.mxu0 0.0
    %179 = vmatpush1.msra.mxu0 %v92
    %180 = vmatprep.subr.mxu0 0.0
    %181 = vmatpush1.msra.mxu0 %v93
    %182 = vmatprep.subr.mxu0 0.0
    %183 = vmatpush1.msra.mxu0 %v94
    %184 = vmatprep.subr.mxu0 0.0
    %185 = vmatpush1.msra.mxu0 %v95
    %186 = vmatprep.subr.mxu0 0.0
    %187 = vmatpush1.msra.mxu0 0.0
    %188 = vmatprep.subr.mxu0 0.0
    %189 = vmatpush1.msra.mxu0 0.0
    %190 = vmatprep.subr.mxu0 0.0
    %191 = vmatpush1.msra.mxu0 0.0
    %192 = vmatprep.subr.mxu0 0.0
    %193 = vmatpush1.msra.mxu0 0.0
    %194 = vmatprep.subr.mxu0 0.0
    %195 = vmatpush1.msra.mxu0 0.0
    %196 = vmatprep.subr.mxu0 0.0
    %197 = vmatpush1.msra.mxu0 0.0
    %198 = vmatprep.subr.mxu0 0.0
    %199 = vmatpush1.msra.mxu0 0.0
    %200 = vmatprep.subr.mxu0 0.0
    %201 = vmatpush1.msra.mxu0 0.0
    %202 = vmatprep.subr.mxu0 0.0
    %203 = vmatpush1.msra.mxu0 0.0
    %204 = vmatprep.subr.mxu0 0.0
    %205 = vmatpush1.msra.mxu0 0.0
    %206 = vmatprep.subr.mxu0 0.0
    %207 = vmatpush1.msra.mxu0 0.0
    %208 = vmatprep.subr.mxu0 0.0
    %209 = vmatpush1.msra.mxu0 0.0
    %210 = vmatprep.subr.mxu0 0.0
    %211 = vmatpush1.msra.mxu0 0.0
    %212 = vmatprep.subr.mxu0 0.0
    %213 = vmatpush1.msra.mxu0 0.0
    %214 = vmatprep.subr.mxu0 0.0
    %215 = vmatpush1.msra.mxu0 0.0
    %216 = vmatprep.subr.mxu0 0.0
    %217 = vmatpush1.msra.mxu0 0.0
    %218 = vmatprep.subr.mxu0 0.0
    %219 = vmatpush1.msra.mxu0 0.0
    %220 = vmatprep.subr.mxu0 0.0
    %221 = vmatpush1.msra.mxu0 0.0
    %222 = vmatprep.subr.mxu0 0.0
    %223 = vmatpush1.msra.mxu0 0.0
    %224 = vmatprep.subr.mxu0 0.0
    %225 = vmatpush1.msra.mxu0 0.0
    %226 = vmatprep.subr.mxu0 0.0
    %227 = vmatpush1.msra.mxu0 0.0
    %228 = vmatprep.subr.mxu0 0.0
    %229 = vmatpush1.msra.mxu0 0.0
    %230 = vmatprep.subr.mxu0 0.0
    %231 = vmatpush1.msra.mxu0 0.0
    %232 = vmatprep.subr.mxu0 0.0
    %233 = vmatpush1.msra.mxu0 0.0
    %234 = vmatprep.subr.mxu0 0.0
    %235 = vmatpush1.msra.mxu0 0.0
    %236 = vmatprep.subr.mxu0 0.0
    %237 = vmatpush1.msra.mxu0 0.0
    %238 = vmatprep.subr.mxu0 0.0
    %239 = vmatpush1.msra.mxu0 0.0
    %240 = vmatprep.subr.mxu0 0.0
    %241 = vmatpush1.msra.mxu0 0.0
    %242 = vmatprep.mubr.f32.mxu0 0.0
    %243 = vmatmul.mubr.f32.gmra.mrb[0].mxu0 %v176
    %v244 = vpop.f32.mrb[0].mxu0
    %v245 = vadd.f32 %v172, %v244
    %v246 = vpop.f32.mrb[0].mxu0
    %247 = vdwg.mxu0
    %v248 = vld [vmem:[%s4] sm:$0x1]
    %v250 = vlaneseq
    %v251 = vshrl.u32 %v250, 7
    %v252 = vsub.s32 0, %v251
    %v253 = vrot.slane %v248, %v252
    %v255 = vadd.f32 %v245, %v253
    %v256 = vmax.f32 %v255, 0.0
    %v257 = vld [vmem:[#allocation10] sm:$0xff]
    %v258 = vld [vmem:[#allocation10 + $0x8] sm:$0xff]
    %v259 = vld [vmem:[#allocation10 + $0x10] sm:$0xff]
    %v260 = vld [vmem:[#allocation10 + $0x18] sm:$0xff]
    %v261 = vld [vmem:[#allocation10 + $0x20] sm:$0xff]
    %v262 = vld [vmem:[#allocation10 + $0x28] sm:$0xff]
    %v263 = vld [vmem:[#allocation10 + $0x30] sm:$0xff]
    %v264 = vld [vmem:[#allocation10 + $0x38] sm:$0xff]
    %v265 = vld [vmem:[#allocation10 + $0x40] sm:$0xff]
    %v266 = vld [vmem:[#allocation10 + $0x48] sm:$0xff]
    %v267 = vld [vmem:[#allocation10 + $0x50] sm:$0xff]
    %v268 = vld [vmem:[#allocation10 + $0x58] sm:$0xff]
    %v269 = vld [vmem:[#allocation10 + $0x60] sm:$0xff]
    %v270 = vld [vmem:[#allocation10 + $0x68] sm:$0xff]
    %v271 = vld [vmem:[#allocation10 + $0x70] sm:$0xff]
    %v272 = vld [vmem:[#allocation10 + $0x78] sm:$0xff]
    %v273 = vld [vmem:[%s6] sm:$0x1]
    %v275 = vlaneseq
    %v276 = vshrl.u32 %v275, 7
    %v277 = vsub.s32 0, %v276
    %v278 = vrot.slane %v273, %v277
    %280 = vmatprep.subr.mxu0 0.0
    %281 = vmatpush1.msra.mxu0 %v257
    %282 = vmatprep.subr.mxu0 0.0
    %283 = vmatpush1.msra.mxu0 %v258
    %284 = vmatprep.subr.mxu0 0.0
    %285 = vmatpush1.msra.mxu0 %v259
    %286 = vmatprep.subr.mxu0 0.0
    %287 = vmatpush1.msra.mxu0 %v260
    %288 = vmatprep.subr.mxu0 0.0
    %289 = vmatpush1.msra.mxu0 %v261
    %290 = vmatprep.subr.mxu0 0.0
    %291 = vmatpush1.msra.mxu0 %v262
    %292 = vmatprep.subr.mxu0 0.0
    %293 = vmatpush1.msra.mxu0 %v263
    %294 = vmatprep.subr.mxu0 0.0
    %295 = vmatpush1.msra.mxu0 %v264
    %296 = vmatprep.subr.mxu0 0.0
    %297 = vmatpush1.msra.mxu0 %v265
    %298 = vmatprep.subr.mxu0 0.0
    %299 = vmatpush1.msra.mxu0 %v266
    %300 = vmatprep.subr.mxu0 0.0
    %301 = vmatpush1.msra.mxu0 %v267
    %302 = vmatprep.subr.mxu0 0.0
    %303 = vmatpush1.msra.mxu0 %v268
    %304 = vmatprep.subr.mxu0 0.0
    %305 = vmatpush1.msra.mxu0 %v269
    %306 = vmatprep.subr.mxu0 0.0
    %307 = vmatpush1.msra.mxu0 %v270
    %308 = vmatprep.subr.mxu0 0.0
    %309 = vmatpush1.msra.mxu0 %v271
    %310 = vmatprep.subr.mxu0 0.0
    %311 = vmatpush1.msra.mxu0 %v272
    %312 = vmatprep.subr.mxu0 0.0
    %313 = vmatpush1.msra.mxu0 0.0
    %314 = vmatprep.subr.mxu0 0.0
    %315 = vmatpush1.msra.mxu0 0.0
    %316 = vmatprep.subr.mxu0 0.0
    %317 = vmatpush1.msra.mxu0 0.0
    %318 = vmatprep.subr.mxu0 0.0
    %319 = vmatpush1.msra.mxu0 0.0
    %320 = vmatprep.subr.mxu0 0.0
    %321 = vmatpush1.msra.mxu0 0.0
    %322 = vmatprep.subr.mxu0 0.0
    %323 = vmatpush1.msra.mxu0 0.0
    %324 = vmatprep.subr.mxu0 0.0
    %325 = vmatpush1.msra.mxu0 0.0
    %326 = vmatprep.subr.mxu0 0.0
    %327 = vmatpush1.msra.mxu0 0.0
    %328 = vmatprep.subr.mxu0 0.0
    %329 = vmatpush1.msra.mxu0 0.0
    %330 = vmatprep.subr.mxu0 0.0
    %331 = vmatpush1.msra.mxu0 0.0
    %332 = vmatprep.subr.mxu0 0.0
    %333 = vmatpush1.msra.mxu0 0.0
    %334 = vmatprep.subr.mxu0 0.0
    %335 = vmatpush1.msra.mxu0 0.0
    %336 = vmatprep.subr.mxu0 0.0
    %337 = vmatpush1.msra.mxu0 0.0
    %338 = vmatprep.subr.mxu0 0.0
    %339 = vmatpush1.msra.mxu0 0.0
    %340 = vmatprep.subr.mxu0 0.0
    %341 = vmatpush1.msra.mxu0 0.0
    %342 = vmatprep.subr.mxu0 0.0
    %343 = vmatpush1.msra.mxu0 0.0
    %344 = vmatprep.mubr.f32.mxu0 0.0
    %345 = vmatmul.mubr.f32.gmra.mrb[0].mxu0 %v256
    %v346 = vpop.f32.mrb[0].mxu0
    %v347 = vadd.f32 %v278, %v346
    %v348 = vpop.f32.mrb[0].mxu0
    %349 = vdwg.mxu0
    %v350 = vmax.f32 %v347, 0.0
    %vm351 = vcmask 257024
    %352 = vst.msk [vmem:[#allocation11] sm:$0xf] %vm351, %v350
    // Predicated region
    $region50: #{to_action_forward.1} parent=1 // pred_check
      _
    $region51: #{to_action_forward.1} parent=1 // pred_check_branch
      %354 = sbr.rel (0) target = $region53
    $region52: #{to_action_forward.1} parent=1 // pred_region
      %s356 = ssub.s32 64, 64
      %357 = vsyncadd [#allocation4], %s356
      %s359 = sshll.u32 [#allocation11], 4
      %s360 = int_to_ptr.vmem [resolvable:$true] %s359
      %362 = dma.vmem_to_hbm [thread:$0]  %s360, 64, %s7, [#allocation4]
    $region53: #{to_action_forward.1} parent=1 // pred_fallthru
      _
    // Predicated region
    $region54: #{to_action_forward.1} parent=1 // pred_check
      _
    $region55: #{to_action_forward.1} parent=1 // pred_check_branch
      %364 = sbr.rel (0) target = $region57
    $region56: #{to_action_forward.1} parent=1 // pred_region
      %365 = dma.done [#allocation4], 64
    $region57: #{to_action_forward.1} parent=1 // pred_fallthru
      _
    %366 = vsyncpa [#allocation3], 1
    %367 = vsyncpa [#allocation6], 1
    %368 = vsyncpa [#allocation9], 1
    %369 = vsyncpa [#allocation4], 1

</llo_original>
